<compile_context>
chip_gen: v7x
topology: tpu7x:2x2x1
jax: 0.10.0
libtpu: 0.0.40
codegen_flags: <defaults>
</compile_context>

<pallas_src>
import jax
import jax.numpy as jnp
from jax import lax
from jax.experimental import pallas as pl
from jax.experimental.pallas import tpu as pltpu


def _round_up(x, m):
    return ((x + m - 1) // m) * m


def _make_kernel(batch):
    """batch = true (unpadded) batch size, used to clamp padded rows."""

    def kernel(tgt_ref, x_hbm, w_ref, b_ref, o_ref, xbuf, sem):
        # tgt_ref : SMEM (B,) int32      -- scalar-prefetched target indices
        # x_hbm   : HBM  (B, S, H)       -- raw ref, gathered manually via DMA
        # w_ref   : VMEM (H, H)          -- pre-transposed weight (in, out)
        # b_ref   : VMEM (1, H)          -- bias
        # o_ref   : VMEM (TB, H)         -- pooled output tile
        # xbuf    : VMEM (TB, H) scratch -- gathered EOS rows
        # sem     : DMA sems (TB,)
        tb = xbuf.shape[0]
        base = pl.program_id(0) * tb

        # Gather TB token rows: issue all row DMAs first, then wait on all of
        # them, so the copies overlap each other.
        copies = []
        for r in range(tb):
            b = jnp.minimum(base + r, batch - 1)  # clamp rows past true batch
            t = tgt_ref[b]
            cp = pltpu.make_async_copy(
                x_hbm.at[b, pl.ds(t, 1), :],   # (1, H) row in HBM
                xbuf.at[pl.ds(r, 1), :],       # (1, H) slot in VMEM
                sem.at[r],
            )
            cp.start()
            copies.append(cp)
        for cp in copies:
            cp.wait()

        # One dense (TB, H) @ (H, H) matmul; weight already transposed, so no
        # in-kernel transpose is needed.
        y = jnp.dot(
            xbuf[...],
            w_ref[...],
            preferred_element_type=jnp.float32,
            precision=lax.Precision.HIGHEST,
        )
        y = y + b_ref[...].astype(jnp.float32)
        o_ref[...] = jnp.tanh(y).astype(o_ref.dtype)

    return kernel


def bert_last_pooler(hidden_states, targetind, weight, bias, *, block_b=128):
    """hidden_states: (B, S, H), targetind: (B,) int, weight: (H, H) as
    nn.Linear (out, in), bias: (H,)  ->  (B, H)."""
    B, S, H = hidden_states.shape
    out_dtype = hidden_states.dtype

    # Batch tile: multiple of 8 for sublane-dense output stores; pad the output
    # (only) up to a multiple of TB — padded rows recompute row B-1 harmlessly.
    tb = min(block_b, _round_up(B, 8))
    b_pad = _round_up(B, tb)
    n_blocks = b_pad // tb

    w_t = weight.T                      # (in, out): contraction is x @ w_t
    bias2d = bias.reshape(1, H)
    targetind = targetind.astype(jnp.int32)

    grid_spec = pltpu.PrefetchScalarGridSpec(
        num_scalar_prefetch=1,          # targetind -> SMEM
        grid=(n_blocks,),
        in_specs=[
            # hidden_states stays in HBM; gathered in-kernel via DMA.
            pl.BlockSpec(memory_space=pl.ANY),
            # Resident weight / bias: constant index_map, single-buffered.
            pl.BlockSpec((H, H), lambda i, tgt: (0, 0),
                         pipeline_mode=pl.Buffered(1)),
            pl.BlockSpec((1, H), lambda i, tgt: (0, 0),
                         pipeline_mode=pl.Buffered(1)),
        ],
        out_specs=pl.BlockSpec((tb, H), lambda i, tgt: (i, 0)),
        scratch_shapes=[
            pltpu.VMEM((tb, H), hidden_states.dtype),  # gathered rows
            pltpu.SemaphoreType.DMA((tb,)),
        ],
    )

    out = pl.pallas_call(
        _make_kernel(B),
        out_shape=jax.ShapeDtypeStruct((b_pad, H), out_dtype),
        grid_spec=grid_spec,
        compiler_params=pltpu.CompilerParams(
            dimension_semantics=("parallel",)),
    )(targetind, hidden_states, w_t, bias2d)

    return out[:B]


def _reference(hidden_states, targetind, weight, bias):
    gathered = hidden_states[jnp.arange(hidden_states.shape[0]), targetind]
    y = jnp.dot(gathered, weight.T, precision=lax.Precision.HIGHEST) + bias
    return jnp.tanh(y)


if __name__ == "__main__":
    B, S, H = 2, 8, 128  # small shapes; hidden_size = 128

    key = jax.random.PRNGKey(0)
    k_h, k_w, k_b, k_t = jax.random.split(key, 4)

    hidden_states = jax.random.normal(k_h, (B, S, H), dtype=jnp.float32)
    # deterministic "initialization" of nn.Linear(hidden_size, hidden_size)
    weight = jax.random.normal(k_w, (H, H), dtype=jnp.float32) * 0.02
    bias = jax.random.normal(k_b, (H,), dtype=jnp.float32) * 0.02
    targetind = jax.random.randint(k_t, (B,), 0, S, dtype=jnp.int32)

    out = bert_last_pooler(hidden_states, targetind, weight, bias)
    out = jax.block_until_ready(out)

    ref = _reference(hidden_states, targetind, weight, bias)
    assert out.shape == (B, H), out.shape
    assert jnp.allclose(out, ref, atol=1e-4, rtol=1e-4), "mismatch vs reference"

    print("KERNEL_OK")
</pallas_src>

<mosaic_0001>
module attributes {stable_mosaic.version = 11 : i64} {
  func.func @kernel(%arg0: i32, %arg1: memref<2xi32, #tpu.memory_space<smem>>, %arg2: memref<2x8x128xf32, #tpu.memory_space<any>>, %arg3: memref<128x128xf32, #tpu.memory_space<vmem>>, %arg4: memref<1x128xf32, #tpu.memory_space<vmem>>, %arg5: memref<8x128xf32, #tpu.memory_space<vmem>>, %arg6: memref<8x128xf32, #tpu.memory_space<vmem>>, %arg7: memref<8x!tpu.dma_semaphore, #tpu.memory_space<semaphore_mem>>) attributes {dimension_semantics = [#tpu.dimension_semantics<parallel>], iteration_bounds = array<i64: 1>, scalar_prefetch = 1 : i64, scratch_operands = 2 : i64, tpu.core_type = #tpu.core_type<tc>, window_params = [{}, {pipeline_mode = #tpu.pipeline_mode<synchronous>, transform_indices = @transform_1, window_bounds = array<i64: 128, 128>}, {pipeline_mode = #tpu.pipeline_mode<synchronous>, transform_indices = @transform_2, window_bounds = array<i64: 1, 128>}, {transform_indices = @transform_3, window_bounds = array<i64: 8, 128>}]} {
    %c8_i32 = arith.constant 8 : i32
    %0 = arith.muli %arg0, %c8_i32 : i32
    %c0_i32 = arith.constant 0 : i32
    %1 = arith.addi %0, %c0_i32 : i32
    %c1_i32 = arith.constant 1 : i32
    %2 = arith.minsi %1, %c1_i32 : i32
    %3 = arith.index_cast %2 : i32 to index
    %4 = memref.load %arg1[%3] : memref<2xi32, #tpu.memory_space<smem>>
    %c0_i32_0 = arith.constant 0 : i32
    %c0_i32_1 = arith.constant 0 : i32
    %5 = tpu.memref_slice %arg2[%2, %4, %c0_i32_1] : memref<2x8x128xf32, #tpu.memory_space<any>> -> memref<1x1x128xf32, #tpu.memory_space<any>>
    %6 = tpu.memref_squeeze %5 : memref<1x1x128xf32, #tpu.memory_space<any>> -> memref<1x128xf32, #tpu.memory_space<any>>
    %c0_i32_2 = arith.constant 0 : i32
    %c0_i32_3 = arith.constant 0 : i32
    %7 = tpu.memref_slice %arg6[%c0_i32_2, %c0_i32_3] : memref<8x128xf32, #tpu.memory_space<vmem>> -> memref<1x128xf32, #tpu.memory_space<vmem>>
    %8 = tpu.memref_slice %arg7[%c0_i32_0] : memref<8x!tpu.dma_semaphore, #tpu.memory_space<semaphore_mem>> -> memref<1x!tpu.dma_semaphore, #tpu.memory_space<semaphore_mem>>
    %9 = tpu.memref_squeeze %8 : memref<1x!tpu.dma_semaphore, #tpu.memory_space<semaphore_mem>> -> memref<!tpu.dma_semaphore, #tpu.memory_space<semaphore_mem>>
    tpu.enqueue_dma source(%6 : memref<1x128xf32, #tpu.memory_space<any>>) target(%7 : memref<1x128xf32, #tpu.memory_space<vmem>>) target_semaphore(%9 : memref<!tpu.dma_semaphore, #tpu.memory_space<semaphore_mem>>)
    %c1_i32_4 = arith.constant 1 : i32
    %10 = arith.addi %0, %c1_i32_4 : i32
    %c1_i32_5 = arith.constant 1 : i32
    %11 = arith.minsi %10, %c1_i32_5 : i32
    %12 = arith.index_cast %11 : i32 to index
    %13 = memref.load %arg1[%12] : memref<2xi32, #tpu.memory_space<smem>>
    %c1_i32_6 = arith.constant 1 : i32
    %c0_i32_7 = arith.constant 0 : i32
    %14 = tpu.memref_slice %arg2[%11, %13, %c0_i32_7] : memref<2x8x128xf32, #tpu.memory_space<any>> -> memref<1x1x128xf32, #tpu.memory_space<any>>
    %15 = tpu.memref_squeeze %14 : memref<1x1x128xf32, #tpu.memory_space<any>> -> memref<1x128xf32, #tpu.memory_space<any>>
    %c1_i32_8 = arith.constant 1 : i32
    %c0_i32_9 = arith.constant 0 : i32
    %16 = tpu.memref_slice %arg6[%c1_i32_8, %c0_i32_9] : memref<8x128xf32, #tpu.memory_space<vmem>> -> memref<1x128xf32, #tpu.memory_space<vmem>>
    %17 = tpu.memref_slice %arg7[%c1_i32_6] : memref<8x!tpu.dma_semaphore, #tpu.memory_space<semaphore_mem>> -> memref<1x!tpu.dma_semaphore, #tpu.memory_space<semaphore_mem>>
    %18 = tpu.memref_squeeze %17 : memref<1x!tpu.dma_semaphore, #tpu.memory_space<semaphore_mem>> -> memref<!tpu.dma_semaphore, #tpu.memory_space<semaphore_mem>>
    tpu.enqueue_dma source(%15 : memref<1x128xf32, #tpu.memory_space<any>>) target(%16 : memref<1x128xf32, #tpu.memory_space<vmem>>) target_semaphore(%18 : memref<!tpu.dma_semaphore, #tpu.memory_space<semaphore_mem>>)
    %c2_i32 = arith.constant 2 : i32
    %19 = arith.addi %0, %c2_i32 : i32
    %c1_i32_10 = arith.constant 1 : i32
    %20 = arith.minsi %19, %c1_i32_10 : i32
    %21 = arith.index_cast %20 : i32 to index
    %22 = memref.load %arg1[%21] : memref<2xi32, #tpu.memory_space<smem>>
    %c2_i32_11 = arith.constant 2 : i32
    %c0_i32_12 = arith.constant 0 : i32
    %23 = tpu.memref_slice %arg2[%20, %22, %c0_i32_12] : memref<2x8x128xf32, #tpu.memory_space<any>> -> memref<1x1x128xf32, #tpu.memory_space<any>>
    %24 = tpu.memref_squeeze %23 : memref<1x1x128xf32, #tpu.memory_space<any>> -> memref<1x128xf32, #tpu.memory_space<any>>
    %c2_i32_13 = arith.constant 2 : i32
    %c0_i32_14 = arith.constant 0 : i32
    %25 = tpu.memref_slice %arg6[%c2_i32_13, %c0_i32_14] : memref<8x128xf32, #tpu.memory_space<vmem>> -> memref<1x128xf32, #tpu.memory_space<vmem>>
    %26 = tpu.memref_slice %arg7[%c2_i32_11] : memref<8x!tpu.dma_semaphore, #tpu.memory_space<semaphore_mem>> -> memref<1x!tpu.dma_semaphore, #tpu.memory_space<semaphore_mem>>
    %27 = tpu.memref_squeeze %26 : memref<1x!tpu.dma_semaphore, #tpu.memory_space<semaphore_mem>> -> memref<!tpu.dma_semaphore, #tpu.memory_space<semaphore_mem>>
    tpu.enqueue_dma source(%24 : memref<1x128xf32, #tpu.memory_space<any>>) target(%25 : memref<1x128xf32, #tpu.memory_space<vmem>>) target_semaphore(%27 : memref<!tpu.dma_semaphore, #tpu.memory_space<semaphore_mem>>)
    %c3_i32 = arith.constant 3 : i32
    %28 = arith.addi %0, %c3_i32 : i32
    %c1_i32_15 = arith.constant 1 : i32
    %29 = arith.minsi %28, %c1_i32_15 : i32
    %30 = arith.index_cast %29 : i32 to index
    %31 = memref.load %arg1[%30] : memref<2xi32, #tpu.memory_space<smem>>
    %c3_i32_16 = arith.constant 3 : i32
    %c0_i32_17 = arith.constant 0 : i32
    %32 = tpu.memref_slice %arg2[%29, %31, %c0_i32_17] : memref<2x8x128xf32, #tpu.memory_space<any>> -> memref<1x1x128xf32, #tpu.memory_space<any>>
    %33 = tpu.memref_squeeze %32 : memref<1x1x128xf32, #tpu.memory_space<any>> -> memref<1x128xf32, #tpu.memory_space<any>>
    %c3_i32_18 = arith.constant 3 : i32
    %c0_i32_19 = arith.constant 0 : i32
    %34 = tpu.memref_slice %arg6[%c3_i32_18, %c0_i32_19] : memref<8x128xf32, #tpu.memory_space<vmem>> -> memref<1x128xf32, #tpu.memory_space<vmem>>
    %35 = tpu.memref_slice %arg7[%c3_i32_16] : memref<8x!tpu.dma_semaphore, #tpu.memory_space<semaphore_mem>> -> memref<1x!tpu.dma_semaphore, #tpu.memory_space<semaphore_mem>>
    %36 = tpu.memref_squeeze %35 : memref<1x!tpu.dma_semaphore, #tpu.memory_space<semaphore_mem>> -> memref<!tpu.dma_semaphore, #tpu.memory_space<semaphore_mem>>
    tpu.enqueue_dma source(%33 : memref<1x128xf32, #tpu.memory_space<any>>) target(%34 : memref<1x128xf32, #tpu.memory_space<vmem>>) target_semaphore(%36 : memref<!tpu.dma_semaphore, #tpu.memory_space<semaphore_mem>>)
    %c4_i32 = arith.constant 4 : i32
    %37 = arith.addi %0, %c4_i32 : i32
    %c1_i32_20 = arith.constant 1 : i32
    %38 = arith.minsi %37, %c1_i32_20 : i32
    %39 = arith.index_cast %38 : i32 to index
    %40 = memref.load %arg1[%39] : memref<2xi32, #tpu.memory_space<smem>>
    %c4_i32_21 = arith.constant 4 : i32
    %c0_i32_22 = arith.constant 0 : i32
    %41 = tpu.memref_slice %arg2[%38, %40, %c0_i32_22] : memref<2x8x128xf32, #tpu.memory_space<any>> -> memref<1x1x128xf32, #tpu.memory_space<any>>
    %42 = tpu.memref_squeeze %41 : memref<1x1x128xf32, #tpu.memory_space<any>> -> memref<1x128xf32, #tpu.memory_space<any>>
    %c4_i32_23 = arith.constant 4 : i32
    %c0_i32_24 = arith.constant 0 : i32
    %43 = tpu.memref_slice %arg6[%c4_i32_23, %c0_i32_24] : memref<8x128xf32, #tpu.memory_space<vmem>> -> memref<1x128xf32, #tpu.memory_space<vmem>>
    %44 = tpu.memref_slice %arg7[%c4_i32_21] : memref<8x!tpu.dma_semaphore, #tpu.memory_space<semaphore_mem>> -> memref<1x!tpu.dma_semaphore, #tpu.memory_space<semaphore_mem>>
    %45 = tpu.memref_squeeze %44 : memref<1x!tpu.dma_semaphore, #tpu.memory_space<semaphore_mem>> -> memref<!tpu.dma_semaphore, #tpu.memory_space<semaphore_mem>>
    tpu.enqueue_dma source(%42 : memref<1x128xf32, #tpu.memory_space<any>>) target(%43 : memref<1x128xf32, #tpu.memory_space<vmem>>) target_semaphore(%45 : memref<!tpu.dma_semaphore, #tpu.memory_space<semaphore_mem>>)
    %c5_i32 = arith.constant 5 : i32
    %46 = arith.addi %0, %c5_i32 : i32
    %c1_i32_25 = arith.constant 1 : i32
    %47 = arith.minsi %46, %c1_i32_25 : i32
    %48 = arith.index_cast %47 : i32 to index
    %49 = memref.load %arg1[%48] : memref<2xi32, #tpu.memory_space<smem>>
    %c5_i32_26 = arith.constant 5 : i32
    %c0_i32_27 = arith.constant 0 : i32
    %50 = tpu.memref_slice %arg2[%47, %49, %c0_i32_27] : memref<2x8x128xf32, #tpu.memory_space<any>> -> memref<1x1x128xf32, #tpu.memory_space<any>>
    %51 = tpu.memref_squeeze %50 : memref<1x1x128xf32, #tpu.memory_space<any>> -> memref<1x128xf32, #tpu.memory_space<any>>
    %c5_i32_28 = arith.constant 5 : i32
    %c0_i32_29 = arith.constant 0 : i32
    %52 = tpu.memref_slice %arg6[%c5_i32_28, %c0_i32_29] : memref<8x128xf32, #tpu.memory_space<vmem>> -> memref<1x128xf32, #tpu.memory_space<vmem>>
    %53 = tpu.memref_slice %arg7[%c5_i32_26] : memref<8x!tpu.dma_semaphore, #tpu.memory_space<semaphore_mem>> -> memref<1x!tpu.dma_semaphore, #tpu.memory_space<semaphore_mem>>
    %54 = tpu.memref_squeeze %53 : memref<1x!tpu.dma_semaphore, #tpu.memory_space<semaphore_mem>> -> memref<!tpu.dma_semaphore, #tpu.memory_space<semaphore_mem>>
    tpu.enqueue_dma source(%51 : memref<1x128xf32, #tpu.memory_space<any>>) target(%52 : memref<1x128xf32, #tpu.memory_space<vmem>>) target_semaphore(%54 : memref<!tpu.dma_semaphore, #tpu.memory_space<semaphore_mem>>)
    %c6_i32 = arith.constant 6 : i32
    %55 = arith.addi %0, %c6_i32 : i32
    %c1_i32_30 = arith.constant 1 : i32
    %56 = arith.minsi %55, %c1_i32_30 : i32
    %57 = arith.index_cast %56 : i32 to index
    %58 = memref.load %arg1[%57] : memref<2xi32, #tpu.memory_space<smem>>
    %c6_i32_31 = arith.constant 6 : i32
    %c0_i32_32 = arith.constant 0 : i32
    %59 = tpu.memref_slice %arg2[%56, %58, %c0_i32_32] : memref<2x8x128xf32, #tpu.memory_space<any>> -> memref<1x1x128xf32, #tpu.memory_space<any>>
    %60 = tpu.memref_squeeze %59 : memref<1x1x128xf32, #tpu.memory_space<any>> -> memref<1x128xf32, #tpu.memory_space<any>>
    %c6_i32_33 = arith.constant 6 : i32
    %c0_i32_34 = arith.constant 0 : i32
    %61 = tpu.memref_slice %arg6[%c6_i32_33, %c0_i32_34] : memref<8x128xf32, #tpu.memory_space<vmem>> -> memref<1x128xf32, #tpu.memory_space<vmem>>
    %62 = tpu.memref_slice %arg7[%c6_i32_31] : memref<8x!tpu.dma_semaphore, #tpu.memory_space<semaphore_mem>> -> memref<1x!tpu.dma_semaphore, #tpu.memory_space<semaphore_mem>>
    %63 = tpu.memref_squeeze %62 : memref<1x!tpu.dma_semaphore, #tpu.memory_space<semaphore_mem>> -> memref<!tpu.dma_semaphore, #tpu.memory_space<semaphore_mem>>
    tpu.enqueue_dma source(%60 : memref<1x128xf32, #tpu.memory_space<any>>) target(%61 : memref<1x128xf32, #tpu.memory_space<vmem>>) target_semaphore(%63 : memref<!tpu.dma_semaphore, #tpu.memory_space<semaphore_mem>>)
    %c7_i32 = arith.constant 7 : i32
    %64 = arith.addi %0, %c7_i32 : i32
    %c1_i32_35 = arith.constant 1 : i32
    %65 = arith.minsi %64, %c1_i32_35 : i32
    %66 = arith.index_cast %65 : i32 to index
    %67 = memref.load %arg1[%66] : memref<2xi32, #tpu.memory_space<smem>>
    %c7_i32_36 = arith.constant 7 : i32
    %c0_i32_37 = arith.constant 0 : i32
    %68 = tpu.memref_slice %arg2[%65, %67, %c0_i32_37] : memref<2x8x128xf32, #tpu.memory_space<any>> -> memref<1x1x128xf32, #tpu.memory_space<any>>
    %69 = tpu.memref_squeeze %68 : memref<1x1x128xf32, #tpu.memory_space<any>> -> memref<1x128xf32, #tpu.memory_space<any>>
    %c7_i32_38 = arith.constant 7 : i32
    %c0_i32_39 = arith.constant 0 : i32
    %70 = tpu.memref_slice %arg6[%c7_i32_38, %c0_i32_39] : memref<8x128xf32, #tpu.memory_space<vmem>> -> memref<1x128xf32, #tpu.memory_space<vmem>>
    %71 = tpu.memref_slice %arg7[%c7_i32_36] : memref<8x!tpu.dma_semaphore, #tpu.memory_space<semaphore_mem>> -> memref<1x!tpu.dma_semaphore, #tpu.memory_space<semaphore_mem>>
    %72 = tpu.memref_squeeze %71 : memref<1x!tpu.dma_semaphore, #tpu.memory_space<semaphore_mem>> -> memref<!tpu.dma_semaphore, #tpu.memory_space<semaphore_mem>>
    tpu.enqueue_dma source(%69 : memref<1x128xf32, #tpu.memory_space<any>>) target(%70 : memref<1x128xf32, #tpu.memory_space<vmem>>) target_semaphore(%72 : memref<!tpu.dma_semaphore, #tpu.memory_space<semaphore_mem>>)
    %c0_i32_40 = arith.constant 0 : i32
    %c0_i32_41 = arith.constant 0 : i32
    %73 = tpu.memref_slice %arg2[%2, %4, %c0_i32_41] : memref<2x8x128xf32, #tpu.memory_space<any>> -> memref<1x1x128xf32, #tpu.memory_space<any>>
    %74 = tpu.memref_squeeze %73 : memref<1x1x128xf32, #tpu.memory_space<any>> -> memref<1x128xf32, #tpu.memory_space<any>>
    %c0_i32_42 = arith.constant 0 : i32
    %c0_i32_43 = arith.constant 0 : i32
    %75 = tpu.memref_slice %arg6[%c0_i32_42, %c0_i32_43] : memref<8x128xf32, #tpu.memory_space<vmem>> -> memref<1x128xf32, #tpu.memory_space<vmem>>
    %76 = tpu.memref_slice %arg7[%c0_i32_40] : memref<8x!tpu.dma_semaphore, #tpu.memory_space<semaphore_mem>> -> memref<1x!tpu.dma_semaphore, #tpu.memory_space<semaphore_mem>>
    %77 = tpu.memref_squeeze %76 : memref<1x!tpu.dma_semaphore, #tpu.memory_space<semaphore_mem>> -> memref<!tpu.dma_semaphore, #tpu.memory_space<semaphore_mem>>
    tpu.wait_dma2 semaphore(%77 : memref<!tpu.dma_semaphore, #tpu.memory_space<semaphore_mem>>) src(%74 : memref<1x128xf32, #tpu.memory_space<any>>) dst(%75 : memref<1x128xf32, #tpu.memory_space<vmem>>)
    %c1_i32_44 = arith.constant 1 : i32
    %c0_i32_45 = arith.constant 0 : i32
    %78 = tpu.memref_slice %arg2[%11, %13, %c0_i32_45] : memref<2x8x128xf32, #tpu.memory_space<any>> -> memref<1x1x128xf32, #tpu.memory_space<any>>
    %79 = tpu.memref_squeeze %78 : memref<1x1x128xf32, #tpu.memory_space<any>> -> memref<1x128xf32, #tpu.memory_space<any>>
    %c1_i32_46 = arith.constant 1 : i32
    %c0_i32_47 = arith.constant 0 : i32
    %80 = tpu.memref_slice %arg6[%c1_i32_46, %c0_i32_47] : memref<8x128xf32, #tpu.memory_space<vmem>> -> memref<1x128xf32, #tpu.memory_space<vmem>>
    %81 = tpu.memref_slice %arg7[%c1_i32_44] : memref<8x!tpu.dma_semaphore, #tpu.memory_space<semaphore_mem>> -> memref<1x!tpu.dma_semaphore, #tpu.memory_space<semaphore_mem>>
    %82 = tpu.memref_squeeze %81 : memref<1x!tpu.dma_semaphore, #tpu.memory_space<semaphore_mem>> -> memref<!tpu.dma_semaphore, #tpu.memory_space<semaphore_mem>>
    tpu.wait_dma2 semaphore(%82 : memref<!tpu.dma_semaphore, #tpu.memory_space<semaphore_mem>>) src(%79 : memref<1x128xf32, #tpu.memory_space<any>>) dst(%80 : memref<1x128xf32, #tpu.memory_space<vmem>>)
    %c2_i32_48 = arith.constant 2 : i32
    %c0_i32_49 = arith.constant 0 : i32
    %83 = tpu.memref_slice %arg2[%20, %22, %c0_i32_49] : memref<2x8x128xf32, #tpu.memory_space<any>> -> memref<1x1x128xf32, #tpu.memory_space<any>>
    %84 = tpu.memref_squeeze %83 : memref<1x1x128xf32, #tpu.memory_space<any>> -> memref<1x128xf32, #tpu.memory_space<any>>
    %c2_i32_50 = arith.constant 2 : i32
    %c0_i32_51 = arith.constant 0 : i32
    %85 = tpu.memref_slice %arg6[%c2_i32_50, %c0_i32_51] : memref<8x128xf32, #tpu.memory_space<vmem>> -> memref<1x128xf32, #tpu.memory_space<vmem>>
    %86 = tpu.memref_slice %arg7[%c2_i32_48] : memref<8x!tpu.dma_semaphore, #tpu.memory_space<semaphore_mem>> -> memref<1x!tpu.dma_semaphore, #tpu.memory_space<semaphore_mem>>
    %87 = tpu.memref_squeeze %86 : memref<1x!tpu.dma_semaphore, #tpu.memory_space<semaphore_mem>> -> memref<!tpu.dma_semaphore, #tpu.memory_space<semaphore_mem>>
    tpu.wait_dma2 semaphore(%87 : memref<!tpu.dma_semaphore, #tpu.memory_space<semaphore_mem>>) src(%84 : memref<1x128xf32, #tpu.memory_space<any>>) dst(%85 : memref<1x128xf32, #tpu.memory_space<vmem>>)
    %c3_i32_52 = arith.constant 3 : i32
    %c0_i32_53 = arith.constant 0 : i32
    %88 = tpu.memref_slice %arg2[%29, %31, %c0_i32_53] : memref<2x8x128xf32, #tpu.memory_space<any>> -> memref<1x1x128xf32, #tpu.memory_space<any>>
    %89 = tpu.memref_squeeze %88 : memref<1x1x128xf32, #tpu.memory_space<any>> -> memref<1x128xf32, #tpu.memory_space<any>>
    %c3_i32_54 = arith.constant 3 : i32
    %c0_i32_55 = arith.constant 0 : i32
    %90 = tpu.memref_slice %arg6[%c3_i32_54, %c0_i32_55] : memref<8x128xf32, #tpu.memory_space<vmem>> -> memref<1x128xf32, #tpu.memory_space<vmem>>
    %91 = tpu.memref_slice %arg7[%c3_i32_52] : memref<8x!tpu.dma_semaphore, #tpu.memory_space<semaphore_mem>> -> memref<1x!tpu.dma_semaphore, #tpu.memory_space<semaphore_mem>>
    %92 = tpu.memref_squeeze %91 : memref<1x!tpu.dma_semaphore, #tpu.memory_space<semaphore_mem>> -> memref<!tpu.dma_semaphore, #tpu.memory_space<semaphore_mem>>
    tpu.wait_dma2 semaphore(%92 : memref<!tpu.dma_semaphore, #tpu.memory_space<semaphore_mem>>) src(%89 : memref<1x128xf32, #tpu.memory_space<any>>) dst(%90 : memref<1x128xf32, #tpu.memory_space<vmem>>)
    %c4_i32_56 = arith.constant 4 : i32
    %c0_i32_57 = arith.constant 0 : i32
    %93 = tpu.memref_slice %arg2[%38, %40, %c0_i32_57] : memref<2x8x128xf32, #tpu.memory_space<any>> -> memref<1x1x128xf32, #tpu.memory_space<any>>
    %94 = tpu.memref_squeeze %93 : memref<1x1x128xf32, #tpu.memory_space<any>> -> memref<1x128xf32, #tpu.memory_space<any>>
    %c4_i32_58 = arith.constant 4 : i32
    %c0_i32_59 = arith.constant 0 : i32
    %95 = tpu.memref_slice %arg6[%c4_i32_58, %c0_i32_59] : memref<8x128xf32, #tpu.memory_space<vmem>> -> memref<1x128xf32, #tpu.memory_space<vmem>>
    %96 = tpu.memref_slice %arg7[%c4_i32_56] : memref<8x!tpu.dma_semaphore, #tpu.memory_space<semaphore_mem>> -> memref<1x!tpu.dma_semaphore, #tpu.memory_space<semaphore_mem>>
    %97 = tpu.memref_squeeze %96 : memref<1x!tpu.dma_semaphore, #tpu.memory_space<semaphore_mem>> -> memref<!tpu.dma_semaphore, #tpu.memory_space<semaphore_mem>>
    tpu.wait_dma2 semaphore(%97 : memref<!tpu.dma_semaphore, #tpu.memory_space<semaphore_mem>>) src(%94 : memref<1x128xf32, #tpu.memory_space<any>>) dst(%95 : memref<1x128xf32, #tpu.memory_space<vmem>>)
    %c5_i32_60 = arith.constant 5 : i32
    %c0_i32_61 = arith.constant 0 : i32
    %98 = tpu.memref_slice %arg2[%47, %49, %c0_i32_61] : memref<2x8x128xf32, #tpu.memory_space<any>> -> memref<1x1x128xf32, #tpu.memory_space<any>>
    %99 = tpu.memref_squeeze %98 : memref<1x1x128xf32, #tpu.memory_space<any>> -> memref<1x128xf32, #tpu.memory_space<any>>
    %c5_i32_62 = arith.constant 5 : i32
    %c0_i32_63 = arith.constant 0 : i32
    %100 = tpu.memref_slice %arg6[%c5_i32_62, %c0_i32_63] : memref<8x128xf32, #tpu.memory_space<vmem>> -> memref<1x128xf32, #tpu.memory_space<vmem>>
    %101 = tpu.memref_slice %arg7[%c5_i32_60] : memref<8x!tpu.dma_semaphore, #tpu.memory_space<semaphore_mem>> -> memref<1x!tpu.dma_semaphore, #tpu.memory_space<semaphore_mem>>
    %102 = tpu.memref_squeeze %101 : memref<1x!tpu.dma_semaphore, #tpu.memory_space<semaphore_mem>> -> memref<!tpu.dma_semaphore, #tpu.memory_space<semaphore_mem>>
    tpu.wait_dma2 semaphore(%102 : memref<!tpu.dma_semaphore, #tpu.memory_space<semaphore_mem>>) src(%99 : memref<1x128xf32, #tpu.memory_space<any>>) dst(%100 : memref<1x128xf32, #tpu.memory_space<vmem>>)
    %c6_i32_64 = arith.constant 6 : i32
    %c0_i32_65 = arith.constant 0 : i32
    %103 = tpu.memref_slice %arg2[%56, %58, %c0_i32_65] : memref<2x8x128xf32, #tpu.memory_space<any>> -> memref<1x1x128xf32, #tpu.memory_space<any>>
    %104 = tpu.memref_squeeze %103 : memref<1x1x128xf32, #tpu.memory_space<any>> -> memref<1x128xf32, #tpu.memory_space<any>>
    %c6_i32_66 = arith.constant 6 : i32
    %c0_i32_67 = arith.constant 0 : i32
    %105 = tpu.memref_slice %arg6[%c6_i32_66, %c0_i32_67] : memref<8x128xf32, #tpu.memory_space<vmem>> -> memref<1x128xf32, #tpu.memory_space<vmem>>
    %106 = tpu.memref_slice %arg7[%c6_i32_64] : memref<8x!tpu.dma_semaphore, #tpu.memory_space<semaphore_mem>> -> memref<1x!tpu.dma_semaphore, #tpu.memory_space<semaphore_mem>>
    %107 = tpu.memref_squeeze %106 : memref<1x!tpu.dma_semaphore, #tpu.memory_space<semaphore_mem>> -> memref<!tpu.dma_semaphore, #tpu.memory_space<semaphore_mem>>
    tpu.wait_dma2 semaphore(%107 : memref<!tpu.dma_semaphore, #tpu.memory_space<semaphore_mem>>) src(%104 : memref<1x128xf32, #tpu.memory_space<any>>) dst(%105 : memref<1x128xf32, #tpu.memory_space<vmem>>)
    %c7_i32_68 = arith.constant 7 : i32
    %c0_i32_69 = arith.constant 0 : i32
    %108 = tpu.memref_slice %arg2[%65, %67, %c0_i32_69] : memref<2x8x128xf32, #tpu.memory_space<any>> -> memref<1x1x128xf32, #tpu.memory_space<any>>
    %109 = tpu.memref_squeeze %108 : memref<1x1x128xf32, #tpu.memory_space<any>> -> memref<1x128xf32, #tpu.memory_space<any>>
    %c7_i32_70 = arith.constant 7 : i32
    %c0_i32_71 = arith.constant 0 : i32
    %110 = tpu.memref_slice %arg6[%c7_i32_70, %c0_i32_71] : memref<8x128xf32, #tpu.memory_space<vmem>> -> memref<1x128xf32, #tpu.memory_space<vmem>>
    %111 = tpu.memref_slice %arg7[%c7_i32_68] : memref<8x!tpu.dma_semaphore, #tpu.memory_space<semaphore_mem>> -> memref<1x!tpu.dma_semaphore, #tpu.memory_space<semaphore_mem>>
    %112 = tpu.memref_squeeze %111 : memref<1x!tpu.dma_semaphore, #tpu.memory_space<semaphore_mem>> -> memref<!tpu.dma_semaphore, #tpu.memory_space<semaphore_mem>>
    tpu.wait_dma2 semaphore(%112 : memref<!tpu.dma_semaphore, #tpu.memory_space<semaphore_mem>>) src(%109 : memref<1x128xf32, #tpu.memory_space<any>>) dst(%110 : memref<1x128xf32, #tpu.memory_space<vmem>>)
    %c0 = arith.constant 0 : index
    %c0_72 = arith.constant 0 : index
    %113 = vector.load %arg6[%c0, %c0_72] : memref<8x128xf32, #tpu.memory_space<vmem>>, vector<8x128xf32>
    %c0_73 = arith.constant 0 : index
    %c0_74 = arith.constant 0 : index
    %114 = vector.load %arg3[%c0_73, %c0_74] : memref<128x128xf32, #tpu.memory_space<vmem>>, vector<128x128xf32>
    %cst = arith.constant dense<0.000000e+00> : vector<8x128xf32>
    %115 = tpu.matmul %113, %114, %cst {dimension_numbers = #tpu.dot_dimension_numbers<[1], [0], [0], [1], [0, 0, 1, 1], [], []>, precision = #tpu.contract_precision<fp32>} : vector<8x128xf32>, vector<128x128xf32>, vector<8x128xf32> -> vector<8x128xf32>
    %c0_75 = arith.constant 0 : index
    %c0_76 = arith.constant 0 : index
    %116 = vector.load %arg4[%c0_75, %c0_76] : memref<1x128xf32, #tpu.memory_space<vmem>>, vector<1x128xf32>
    %117 = vector.broadcast %116 : vector<1x128xf32> to vector<8x128xf32>
    %118 = arith.addf %115, %117 : vector<8x128xf32>
    %119 = math.tanh %118 : vector<8x128xf32>
    %c0_77 = arith.constant 0 : index
    %c0_78 = arith.constant 0 : index
    %120 = vector.load %arg5[%c0_77, %c0_78] : memref<8x128xf32, #tpu.memory_space<vmem>>, vector<8x128xf32>
    tpu.vector_store %arg5[%c0_77, %c0_78], %119 {strides = array<i32>} : memref<8x128xf32, #tpu.memory_space<vmem>>, vector<8x128xf32>,
    return
  }
  func.func @transform_1(%arg0: i32, %arg1: memref<2xi32, #tpu.memory_space<smem>>) -> (i32, i32) {
    %c0_i32 = arith.constant 0 : i32
    %c0_i32_0 = arith.constant 0 : i32
    %c0_i32_1 = arith.constant 0 : i32
    return %c0_i32, %c0_i32_0 : i32, i32
  }
  func.func @transform_2(%arg0: i32, %arg1: memref<2xi32, #tpu.memory_space<smem>>) -> (i32, i32) {
    %c0_i32 = arith.constant 0 : i32
    %c0_i32_0 = arith.constant 0 : i32
    %c0_i32_1 = arith.constant 0 : i32
    return %c0_i32, %c0_i32_0 : i32, i32
  }
  func.func @transform_3(%arg0: i32, %arg1: memref<2xi32, #tpu.memory_space<smem>>) -> (i32, i32) {
    %c0_i32 = arith.constant 0 : i32
    %c0_i32_0 = arith.constant 0 : i32
    return %arg0, %c0_i32 : i32, i32
  }
}

</mosaic_0001>

<llo_original>
// kernel: tpu_custom_call.1
$region0: #{tpu_custom_call.1}
  #allocation0 [shape = 'u32[]', space=smem, size = 0x4, offset = 0x4, fixed_abs, tag = 'smem constant byte address 0x4 - core index']
  #allocation1 [shape = 'u32[144,128]{1,0:T(1,128)}', space=vmem, size = 0x12000, scoped, tag = 'internal scratch']
  #allocation2 [shape = 'f32[8,128]{1,0:T(8,128)}', space=vmem, size = 0x1000, scoped, tag = 'scratch operand']
  #allocation3 [shape = 's32[8]{0}', space=sflag, size = 0x20, scoped, tag = 'scratch operand']
  #allocation4 [shape = 's32[1]{0}', space=sflag, size = 0x4, scoped, tag = 'scoped memory for tpu_custom_call.1']
  #allocation5 [shape = 'u8[512]{0}', space=smem, size = 0x200, scoped, tag = 'prefetched SMEM operand 0']
  #allocation10 [shape = 's32[]', space=sflag, size = 0x4, offset = 0, fixed_abs, tag = 'sflag constant byte address 0x0 - dummy sync flag']
  #allocation11 [shape = 's32[]', space=sflag, size = 0x4, offset = 0, fixed_abs, tag = 'sflag constant byte address 0x0 - dummy sync flag']
  #allocation12 [shape = 'u32[]', space=smem, size = 0x4, offset = 0x44, fixed_abs, tag = 'smem constant byte address 0x44 - assertion arg 0']
  #allocation13 [shape = 'u32[]', space=smem, size = 0x4, offset = 0x48, fixed_abs, tag = 'smem constant byte address 0x48 - assertion arg 1']
  #allocation14 [shape = 's32[]', space=sflag, size = 0x4, offset = 0, fixed_abs, tag = 'sflag constant byte address 0x0 - dummy sync flag']
  #allocation15 [shape = 's32[]', space=sflag, size = 0x4, offset = 0, fixed_abs, tag = 'sflag constant byte address 0x0 - dummy sync flag']
  #allocation16 [shape = 's32[]', space=sflag, size = 0x4, offset = 0, fixed_abs, tag = 'sflag constant byte address 0x0 - dummy sync flag']
  #allocation17 [shape = 's32[]', space=sflag, size = 0x4, offset = 0, fixed_abs, tag = 'sflag constant byte address 0x0 - dummy sync flag']
  #allocation18 [shape = 's32[]', space=sflag, size = 0x4, offset = 0, fixed_abs, tag = 'sflag constant byte address 0x0 - dummy sync flag']
  #allocation19 [shape = 's32[]', space=sflag, size = 0x4, offset = 0, fixed_abs, tag = 'sflag constant byte address 0x0 - dummy sync flag']
  #allocation20 [shape = 's32[]', space=sflag, size = 0x4, offset = 0, fixed_abs, tag = 'sflag constant byte address 0x0 - dummy sync flag']
  #allocation21 [shape = 's32[]', space=sflag, size = 0x4, offset = 0, fixed_abs, tag = 'sflag constant byte address 0x0 - dummy sync flag']
  #allocation22 [shape = 's32[]', space=sflag, size = 0x4, offset = 0, fixed_abs, tag = 'sflag constant byte address 0x0 - dummy sync flag']
  #allocation23 [shape = 's32[]', space=sflag, size = 0x4, offset = 0, fixed_abs, tag = 'sflag constant byte address 0x0 - dummy sync flag']
  #allocation24 [shape = 's32[]', space=sflag, size = 0x4, offset = 0, fixed_abs, tag = 'sflag constant byte address 0x0 - dummy sync flag']
  #allocation25 [shape = 's32[]', space=sflag, size = 0x4, offset = 0, fixed_abs, tag = 'sflag constant byte address 0x0 - dummy sync flag']
  #allocation26 [shape = 's32[]', space=sflag, size = 0x4, offset = 0, fixed_abs, tag = 'sflag constant byte address 0x0 - dummy sync flag']
  #allocation27 [shape = 's32[]', space=sflag, size = 0x4, offset = 0, fixed_abs, tag = 'sflag constant byte address 0x0 - dummy sync flag']
  %s0 = inlined_call_operand.hbm [shape: s32[2], index: 0, kind: input, shape index: {}]
  %s1 = inlined_call_operand.hbm [shape: f32[2,8,128], index: 1, kind: input, shape index: {}]
  %s2 = inlined_call_operand.hbm [shape: f32[128,128], index: 2, kind: input, shape index: {}]
  %s3 = inlined_call_operand.vmem [shape: f32[1,128], index: 3, kind: input, shape index: {}]
  %s4 = inlined_call_operand.hbm [shape: f32[8,128], index: 4, kind: output, shape index: {}]
  %s5 = sld [smem:[#allocation0]]
  $region54: #{tpu_custom_call.1} parent=0
    _
  %s7 = ssub.s32 1, %s5
  %s8 = scalar_select 0, %s7, %s5
  %10 = dma.hbm_to_smem %s0, 16, [#allocation5], [#allocation4]
  %11 = dma.done [#allocation4], 16
  %12 = sfence
  $region1: #{tpu_custom_call.1} parent=0
    #allocation6 [shape = 'u8[65536]{0}', space=vmem, size = 0x10000, scoped, tag = 'input window, operand 2, single buffered']
    #allocation7 [shape = 's32[1]{0}', space=sflag, size = 0x4, scoped, tag = 'scoped memory for tpu_custom_call.1']
    #allocation8 [shape = 's32[1]{0}', space=sflag, size = 0x4, scoped, tag = 'scoped memory for tpu_custom_call.1']
    #allocation9 [shape = 'u8[4096]{0}', space=vmem, size = 0x1000, scoped, tag = 'output window, operand 0, single buffered']
    %13 = vsyncpa [#allocation7], 0
    %14 = vsyncpa [#allocation8], 0
    // Predicated region
    $region2: #{tpu_custom_call.1} parent=1 // pred_check
      _
    $region3: #{tpu_custom_call.1} parent=1 // pred_check_branch
      %16 = sbr.rel (0) target = $region5
    $region4: #{tpu_custom_call.1} parent=1 // pred_region
      %s18 = ssub.s32 2048, 2048
      %19 = vsyncadd [#allocation7], %s18
      %s20 = sshll.u32 [#allocation6], 4
      %s21 = int_to_ptr.vmem [resolvable:$true] %s20
      %26 = dma.hbm_to_vmem [thread:$0]  %s2, 2048, %s21, [#allocation7], 128, 128, 8
    $region5: #{tpu_custom_call.1} parent=1 // pred_fallthru
      _
    // Predicated region
    $region6: #{tpu_custom_call.1} parent=1 // pred_check
      _
    $region7: #{tpu_custom_call.1} parent=1 // pred_check_branch
      %28 = sbr.rel (0) target = $region9
    $region8: #{tpu_custom_call.1} parent=1 // pred_region
      _
    $region9: #{tpu_custom_call.1} parent=1 // pred_fallthru
      _
    // Predicated region
    $region10: #{tpu_custom_call.1} parent=1 // pred_check
      _
    $region11: #{tpu_custom_call.1} parent=1 // pred_check_branch
      %30 = sbr.rel (0) target = $region13
    $region12: #{tpu_custom_call.1} parent=1 // pred_region
      %31 = dma.done [#allocation7], 2048
    $region13: #{tpu_custom_call.1} parent=1 // pred_fallthru
      _
    %s32 = smul.u32 0, 8
    %p33 = scmp.lt.s32.totalorder %s32, 1
    %s34 = scalar_select %p33, %s32, 1
    %s35 = sld [smem:[#allocation5 + %s34]]
    %s36 = smul.u32 %s34, 8
    %s37 = sadd.s32 %s35, %s36
    %s38 = smul.addr %s37, 16
    %s39 = scalar_lea.hbm %s1, %s38
    // Predicated region
    $region14: #{tpu_custom_call.1} parent=1 // pred_check
      _
    $region15: #{tpu_custom_call.1} parent=1 // pred_check_branch
      %41 = sbr.rel target = $region17
    $region16: #{tpu_custom_call.1} parent=1 // pred_region
      %42 = sst [smem:[#allocation12]] [#allocation11]
      %43 = sst [smem:[#allocation13]] [#allocation10]
    $region17: #{tpu_custom_call.1} parent=1 // pred_fallthru
      _
    %45 = shalt.err (0)
    %s47 = sshll.u32 [#allocation2], 4
    %s48 = int_to_ptr.vmem [resolvable:$true] %s47
    %50 = dma.hbm_to_vmem [thread:$0]  %s39, 16, %s48, [#allocation3]
    %s51 = sadd.s32 %s32, 1
    %p52 = scmp.lt.s32.totalorder %s51, 1
    %s53 = scalar_select %p52, %s51, 1
    %s54 = sld [smem:[#allocation5 + %s53]]
    %s55 = smul.u32 %s53, 8
    %s56 = sadd.s32 %s54, %s55
    %s57 = smul.addr %s56, 16
    %s58 = scalar_lea.hbm %s1, %s57
    %s59 = scalar_lea.vmem [#allocation2], 1
    %s60 = scalar_lea.sflag [#allocation3], 1
    // Predicated region
    $region18: #{tpu_custom_call.1} parent=1 // pred_check
      _
    $region19: #{tpu_custom_call.1} parent=1 // pred_check_branch
      %62 = sbr.rel target = $region21
    $region20: #{tpu_custom_call.1} parent=1 // pred_region
      %63 = sst [smem:[#allocation12]] [#allocation15]
      %64 = sst [smem:[#allocation13]] [#allocation14]
    $region21: #{tpu_custom_call.1} parent=1 // pred_fallthru
      _
    %66 = shalt.err (0)
    %s68 = sshll.u32 %s59, 4
    %s69 = int_to_ptr.vmem [resolvable:$true] %s68
    %71 = dma.hbm_to_vmem [thread:$0]  %s58, 16, %s69, %s60
    %s72 = sadd.s32 %s32, 2
    %p73 = scmp.lt.s32.totalorder %s72, 1
    %s74 = scalar_select %p73, %s72, 1
    %s75 = sld [smem:[#allocation5 + %s74]]
    %s76 = smul.u32 %s74, 8
    %s77 = sadd.s32 %s75, %s76
    %s78 = smul.addr %s77, 16
    %s79 = scalar_lea.hbm %s1, %s78
    %s80 = scalar_lea.vmem [#allocation2], 2
    %s81 = scalar_lea.sflag [#allocation3], 2
    // Predicated region
    $region22: #{tpu_custom_call.1} parent=1 // pred_check
      _
    $region23: #{tpu_custom_call.1} parent=1 // pred_check_branch
      %83 = sbr.rel target = $region25
    $region24: #{tpu_custom_call.1} parent=1 // pred_region
      %84 = sst [smem:[#allocation12]] [#allocation17]
      %85 = sst [smem:[#allocation13]] [#allocation16]
    $region25: #{tpu_custom_call.1} parent=1 // pred_fallthru
      _
    %87 = shalt.err (0)
    %s89 = sshll.u32 %s80, 4
    %s90 = int_to_ptr.vmem [resolvable:$true] %s89
    %92 = dma.hbm_to_vmem [thread:$0]  %s79, 16, %s90, %s81
    %s93 = sadd.s32 %s32, 3
    %p94 = scmp.lt.s32.totalorder %s93, 1
    %s95 = scalar_select %p94, %s93, 1
    %s96 = sld [smem:[#allocation5 + %s95]]
    %s97 = smul.u32 %s95, 8
    %s98 = sadd.s32 %s96, %s97
    %s99 = smul.addr %s98, 16
    %s100 = scalar_lea.hbm %s1, %s99
    %s101 = scalar_lea.vmem [#allocation2], 3
    %s102 = scalar_lea.sflag [#allocation3], 3
    // Predicated region
    $region26: #{tpu_custom_call.1} parent=1 // pred_check
      _
    $region27: #{tpu_custom_call.1} parent=1 // pred_check_branch
      %104 = sbr.rel target = $region29
    $region28: #{tpu_custom_call.1} parent=1 // pred_region
      %105 = sst [smem:[#allocation12]] [#allocation19]
      %106 = sst [smem:[#allocation13]] [#allocation18]
    $region29: #{tpu_custom_call.1} parent=1 // pred_fallthru
      _
    %108 = shalt.err (0)
    %s110 = sshll.u32 %s101, 4
    %s111 = int_to_ptr.vmem [resolvable:$true] %s110
    %113 = dma.hbm_to_vmem [thread:$0]  %s100, 16, %s111, %s102
    %s114 = sadd.s32 %s32, 4
    %p115 = scmp.lt.s32.totalorder %s114, 1
    %s116 = scalar_select %p115, %s114, 1
    %s117 = sld [smem:[#allocation5 + %s116]]
    %s118 = smul.u32 %s116, 8
    %s119 = sadd.s32 %s117, %s118
    %s120 = smul.addr %s119, 16
    %s121 = scalar_lea.hbm %s1, %s120
    %s122 = scalar_lea.vmem [#allocation2], 4
    %s123 = scalar_lea.sflag [#allocation3], 4
    // Predicated region
    $region30: #{tpu_custom_call.1} parent=1 // pred_check
      _
    $region31: #{tpu_custom_call.1} parent=1 // pred_check_branch
      %125 = sbr.rel target = $region33
    $region32: #{tpu_custom_call.1} parent=1 // pred_region
      %126 = sst [smem:[#allocation12]] [#allocation21]
      %127 = sst [smem:[#allocation13]] [#allocation20]
    $region33: #{tpu_custom_call.1} parent=1 // pred_fallthru
      _
    %129 = shalt.err (0)
    %s131 = sshll.u32 %s122, 4
    %s132 = int_to_ptr.vmem [resolvable:$true] %s131
    %134 = dma.hbm_to_vmem [thread:$0]  %s121, 16, %s132, %s123
    %s135 = sadd.s32 %s32, 5
    %p136 = scmp.lt.s32.totalorder %s135, 1
    %s137 = scalar_select %p136, %s135, 1
    %s138 = sld [smem:[#allocation5 + %s137]]
    %s139 = smul.u32 %s137, 8
    %s140 = sadd.s32 %s138, %s139
    %s141 = smul.addr %s140, 16
    %s142 = scalar_lea.hbm %s1, %s141
    %s143 = scalar_lea.vmem [#allocation2], 5
    %s144 = scalar_lea.sflag [#allocation3], 5
    // Predicated region
    $region34: #{tpu_custom_call.1} parent=1 // pred_check
      _
    $region35: #{tpu_custom_call.1} parent=1 // pred_check_branch
      %146 = sbr.rel target = $region37
    $region36: #{tpu_custom_call.1} parent=1 // pred_region
      %147 = sst [smem:[#allocation12]] [#allocation23]
      %148 = sst [smem:[#allocation13]] [#allocation22]
    $region37: #{tpu_custom_call.1} parent=1 // pred_fallthru
      _
    %150 = shalt.err (0)
    %s152 = sshll.u32 %s143, 4
    %s153 = int_to_ptr.vmem [resolvable:$true] %s152
    %155 = dma.hbm_to_vmem [thread:$0]  %s142, 16, %s153, %s144
    %s156 = sadd.s32 %s32, 6
    %p157 = scmp.lt.s32.totalorder %s156, 1
    %s158 = scalar_select %p157, %s156, 1
    %s159 = sld [smem:[#allocation5 + %s158]]
    %s160 = smul.u32 %s158, 8
    %s161 = sadd.s32 %s159, %s160
    %s162 = smul.addr %s161, 16
    %s163 = scalar_lea.hbm %s1, %s162
    %s164 = scalar_lea.vmem [#allocation2], 6
    %s165 = scalar_lea.sflag [#allocation3], 6
    // Predicated region
    $region38: #{tpu_custom_call.1} parent=1 // pred_check
      _
    $region39: #{tpu_custom_call.1} parent=1 // pred_check_branch
      %167 = sbr.rel target = $region41
    $region40: #{tpu_custom_call.1} parent=1 // pred_region
      %168 = sst [smem:[#allocation12]] [#allocation25]
      %169 = sst [smem:[#allocation13]] [#allocation24]
    $region41: #{tpu_custom_call.1} parent=1 // pred_fallthru
      _
    %171 = shalt.err (0)
    %s173 = sshll.u32 %s164, 4
    %s174 = int_to_ptr.vmem [resolvable:$true] %s173
    %176 = dma.hbm_to_vmem [thread:$0]  %s163, 16, %s174, %s165
    %s177 = sadd.s32 %s32, 7
    %p178 = scmp.lt.s32.totalorder %s177, 1
    %s179 = scalar_select %p178, %s177, 1
    %s180 = sld [smem:[#allocation5 + %s179]]
    %s181 = smul.u32 %s179, 8
    %s182 = sadd.s32 %s180, %s181
    %s183 = smul.addr %s182, 16
    %s184 = scalar_lea.hbm %s1, %s183
    %s185 = scalar_lea.vmem [#allocation2], 7
    %s186 = scalar_lea.sflag [#allocation3], 7
    // Predicated region
    $region42: #{tpu_custom_call.1} parent=1 // pred_check
      _
    $region43: #{tpu_custom_call.1} parent=1 // pred_check_branch
      %188 = sbr.rel target = $region45
    $region44: #{tpu_custom_call.1} parent=1 // pred_region
      %189 = sst [smem:[#allocation12]] [#allocation27]
      %190 = sst [smem:[#allocation13]] [#allocation26]
    $region45: #{tpu_custom_call.1} parent=1 // pred_fallthru
      _
    %192 = shalt.err (0)
    %s194 = sshll.u32 %s185, 4
    %s195 = int_to_ptr.vmem [resolvable:$true] %s194
    %197 = dma.hbm_to_vmem [thread:$0]  %s184, 16, %s195, %s186
    %s198 = smul.u32 1, 1
    %s199 = sshll.u32 %s198, 4
    %200 = dma.done [#allocation3], %s199
    %s201 = sshll.u32 %s198, 4
    %202 = dma.done %s60, %s201
    %s203 = sshll.u32 %s198, 4
    %204 = dma.done %s81, %s203
    %s205 = sshll.u32 %s198, 4
    %206 = dma.done %s102, %s205
    %s207 = sshll.u32 %s198, 4
    %208 = dma.done %s123, %s207
    %s209 = sshll.u32 %s198, 4
    %210 = dma.done %s144, %s209
    %s211 = sshll.u32 %s198, 4
    %212 = dma.done %s165, %s211
    %s213 = sshll.u32 %s198, 4
    %214 = dma.done %s186, %s213
    %v215 = vld [vmem:[#allocation2] sm:$0xff]
    %v216 = vld [vmem:[#allocation6] sm:$0xff]
    %v217 = vld [vmem:[#allocation6 + $0x8] sm:$0xff]
    %v218 = vld [vmem:[#allocation6 + $0x10] sm:$0xff]
    %v219 = vld [vmem:[#allocation6 + $0x18] sm:$0xff]
    %v220 = vld [vmem:[#allocation6 + $0x20] sm:$0xff]
    %v221 = vld [vmem:[#allocation6 + $0x28] sm:$0xff]
    %v222 = vld [vmem:[#allocation6 + $0x30] sm:$0xff]
    %v223 = vld [vmem:[#allocation6 + $0x38] sm:$0xff]
    %v224 = vld [vmem:[#allocation6 + $0x40] sm:$0xff]
    %v225 = vld [vmem:[#allocation6 + $0x48] sm:$0xff]
    %v226 = vld [vmem:[#allocation6 + $0x50] sm:$0xff]
    %v227 = vld [vmem:[#allocation6 + $0x58] sm:$0xff]
    %v228 = vld [vmem:[#allocation6 + $0x60] sm:$0xff]
    %v229 = vld [vmem:[#allocation6 + $0x68] sm:$0xff]
    %v230 = vld [vmem:[#allocation6 + $0x70] sm:$0xff]
    %v231 = vld [vmem:[#allocation6 + $0x78] sm:$0xff]
    %v232 = vld [vmem:[%s3] sm:$0x1]
    %v234 = vlaneseq
    %v235 = vshrl.u32 %v234, 7
    %v236 = vsub.s32 0, %v235
    %v237 = vrot.slane %v232, %v236
    %239 = vmatprep.subr.mxu0 0.0
    %v240 = vand.u32 %v216, 4294901760
    %241 = vmatpush1.msra.mxu0 %v240
    %242 = vmatprep.subr.mxu0 0.0
    %v243 = vand.u32 %v217, 4294901760
    %244 = vmatpush1.msra.mxu0 %v243
    %245 = vmatprep.subr.mxu0 0.0
    %v246 = vand.u32 %v218, 4294901760
    %247 = vmatpush1.msra.mxu0 %v246
    %248 = vmatprep.subr.mxu0 0.0
    %v249 = vand.u32 %v219, 4294901760
    %250 = vmatpush1.msra.mxu0 %v249
    %251 = vmatprep.subr.mxu0 0.0
    %v252 = vand.u32 %v220, 4294901760
    %253 = vmatpush1.msra.mxu0 %v252
    %254 = vmatprep.subr.mxu0 0.0
    %v255 = vand.u32 %v221, 4294901760
    %256 = vmatpush1.msra.mxu0 %v255
    %257 = vmatprep.subr.mxu0 0.0
    %v258 = vand.u32 %v222, 4294901760
    %259 = vmatpush1.msra.mxu0 %v258
    %260 = vmatprep.subr.mxu0 0.0
    %v261 = vand.u32 %v223, 4294901760
    %262 = vmatpush1.msra.mxu0 %v261
    %263 = vmatprep.subr.mxu0 0.0
    %v264 = vand.u32 %v224, 4294901760
    %265 = vmatpush1.msra.mxu0 %v264
    %266 = vmatprep.subr.mxu0 0.0
    %v267 = vand.u32 %v225, 4294901760
    %268 = vmatpush1.msra.mxu0 %v267
    %269 = vmatprep.subr.mxu0 0.0
    %v270 = vand.u32 %v226, 4294901760
    %271 = vmatpush1.msra.mxu0 %v270
    %272 = vmatprep.subr.mxu0 0.0
    %v273 = vand.u32 %v227, 4294901760
    %274 = vmatpush1.msra.mxu0 %v273
    %275 = vmatprep.subr.mxu0 0.0
    %v276 = vand.u32 %v228, 4294901760
    %277 = vmatpush1.msra.mxu0 %v276
    %278 = vmatprep.subr.mxu0 0.0
    %v279 = vand.u32 %v229, 4294901760
    %280 = vmatpush1.msra.mxu0 %v279
    %281 = vmatprep.subr.mxu0 0.0
    %v282 = vand.u32 %v230, 4294901760
    %283 = vmatpush1.msra.mxu0 %v282
    %284 = vmatprep.subr.mxu0 0.0
    %v285 = vand.u32 %v231, 4294901760
    %286 = vmatpush1.msra.mxu0 %v285
    %287 = vmatprep.subr.mxu0 0.0
    %288 = vmatpush1.msra.mxu0 0.0
    %289 = vmatprep.subr.mxu0 0.0
    %290 = vmatpush1.msra.mxu0 0.0
    %291 = vmatprep.subr.mxu0 0.0
    %292 = vmatpush1.msra.mxu0 0.0
    %293 = vmatprep.subr.mxu0 0.0
    %294 = vmatpush1.msra.mxu0 0.0
    %295 = vmatprep.subr.mxu0 0.0
    %296 = vmatpush1.msra.mxu0 0.0
    %297 = vmatprep.subr.mxu0 0.0
    %298 = vmatpush1.msra.mxu0 0.0
    %299 = vmatprep.subr.mxu0 0.0
    %300 = vmatpush1.msra.mxu0 0.0
    %301 = vmatprep.subr.mxu0 0.0
    %302 = vmatpush1.msra.mxu0 0.0
    %303 = vmatprep.subr.mxu0 0.0
    %304 = vmatpush1.msra.mxu0 0.0
    %305 = vmatprep.subr.mxu0 0.0
    %306 = vmatpush1.msra.mxu0 0.0
    %307 = vmatprep.subr.mxu0 0.0
    %308 = vmatpush1.msra.mxu0 0.0
    %309 = vmatprep.subr.mxu0 0.0
    %310 = vmatpush1.msra.mxu0 0.0
    %311 = vmatprep.subr.mxu0 0.0
    %312 = vmatpush1.msra.mxu0 0.0
    %313 = vmatprep.subr.mxu0 0.0
    %314 = vmatpush1.msra.mxu0 0.0
    %315 = vmatprep.subr.mxu0 0.0
    %316 = vmatpush1.msra.mxu0 0.0
    %317 = vmatprep.subr.mxu0 0.0
    %318 = vmatpush1.msra.mxu0 0.0
    %319 = vmatprep.mubr.f32.mxu0 0.0
    %v320 = vand.u32 %v215, 4294901760
    %v321 = vsub.f32 %v215, %v320
    %v322 = vand.u32 %v321, 4294901760
    %v323 = vsub.f32 %v321, %v322
    %v324 = vand.u32 %v323, 4294901760
    %325 = vmatmul.mubr.f32.gmra.mrb[0].mxu0 %v324
    %v326 = vpop.f32.mrb[0].mxu0
    %v327 = vadd.f32 %v237, %v326
    %v328 = vpop.f32.mrb[0].mxu0
    %329 = vdwg.mxu0
    %330 = vmatprep.subr.mxu0 0.0
    %v331 = vand.u32 %v216, 4294901760
    %v332 = vsub.f32 %v216, %v331
    %v333 = vand.u32 %v332, 4294901760
    %v334 = vsub.f32 %v332, %v333
    %v335 = vand.u32 %v334, 4294901760
    %336 = vmatpush1.msra.mxu0 %v335
    %337 = vmatprep.subr.mxu0 0.0
    %v338 = vand.u32 %v217, 4294901760
    %v339 = vsub.f32 %v217, %v338
    %v340 = vand.u32 %v339, 4294901760
    %v341 = vsub.f32 %v339, %v340
    %v342 = vand.u32 %v341, 4294901760
    %343 = vmatpush1.msra.mxu0 %v342
    %344 = vmatprep.subr.mxu0 0.0
    %v345 = vand.u32 %v218, 4294901760
    %v346 = vsub.f32 %v218, %v345
    %v347 = vand.u32 %v346, 4294901760
    %v348 = vsub.f32 %v346, %v347
    %v349 = vand.u32 %v348, 4294901760
    %350 = vmatpush1.msra.mxu0 %v349
    %351 = vmatprep.subr.mxu0 0.0
    %v352 = vand.u32 %v219, 4294901760
    %v353 = vsub.f32 %v219, %v352
    %v354 = vand.u32 %v353, 4294901760
    %v355 = vsub.f32 %v353, %v354
    %v356 = vand.u32 %v355, 4294901760
    %357 = vmatpush1.msra.mxu0 %v356
    %358 = vmatprep.subr.mxu0 0.0
    %v359 = vand.u32 %v220, 4294901760
    %v360 = vsub.f32 %v220, %v359
    %v361 = vand.u32 %v360, 4294901760
    %v362 = vsub.f32 %v360, %v361
    %v363 = vand.u32 %v362, 4294901760
    %364 = vmatpush1.msra.mxu0 %v363
    %365 = vmatprep.subr.mxu0 0.0
    %v366 = vand.u32 %v221, 4294901760
    %v367 = vsub.f32 %v221, %v366
    %v368 = vand.u32 %v367, 4294901760
    %v369 = vsub.f32 %v367, %v368
    %v370 = vand.u32 %v369, 4294901760
    %371 = vmatpush1.msra.mxu0 %v370
    %372 = vmatprep.subr.mxu0 0.0
    %v373 = vand.u32 %v222, 4294901760
    %v374 = vsub.f32 %v222, %v373
    %v375 = vand.u32 %v374, 4294901760
    %v376 = vsub.f32 %v374, %v375
    %v377 = vand.u32 %v376, 4294901760
    %378 = vmatpush1.msra.mxu0 %v377
    %379 = vmatprep.subr.mxu0 0.0
    %v380 = vand.u32 %v223, 4294901760
    %v381 = vsub.f32 %v223, %v380
    %v382 = vand.u32 %v381, 4294901760
    %v383 = vsub.f32 %v381, %v382
    %v384 = vand.u32 %v383, 4294901760
    %385 = vmatpush1.msra.mxu0 %v384
    %386 = vmatprep.subr.mxu0 0.0
    %v387 = vand.u32 %v224, 4294901760
    %v388 = vsub.f32 %v224, %v387
    %v389 = vand.u32 %v388, 4294901760
    %v390 = vsub.f32 %v388, %v389
    %v391 = vand.u32 %v390, 4294901760
    %392 = vmatpush1.msra.mxu0 %v391
    %393 = vmatprep.subr.mxu0 0.0
    %v394 = vand.u32 %v225, 4294901760
    %v395 = vsub.f32 %v225, %v394
    %v396 = vand.u32 %v395, 4294901760
    %v397 = vsub.f32 %v395, %v396
    %v398 = vand.u32 %v397, 4294901760
    %399 = vmatpush1.msra.mxu0 %v398
    %400 = vmatprep.subr.mxu0 0.0
    %v401 = vand.u32 %v226, 4294901760
    %v402 = vsub.f32 %v226, %v401
    %v403 = vand.u32 %v402, 4294901760
    %v404 = vsub.f32 %v402, %v403
    %v405 = vand.u32 %v404, 4294901760
    %406 = vmatpush1.msra.mxu0 %v405
    %407 = vmatprep.subr.mxu0 0.0
    %v408 = vand.u32 %v227, 4294901760
    %v409 = vsub.f32 %v227, %v408
    %v410 = vand.u32 %v409, 4294901760
    %v411 = vsub.f32 %v409, %v410
    %v412 = vand.u32 %v411, 4294901760
    %413 = vmatpush1.msra.mxu0 %v412
    %414 = vmatprep.subr.mxu0 0.0
    %v415 = vand.u32 %v228, 4294901760
    %v416 = vsub.f32 %v228, %v415
    %v417 = vand.u32 %v416, 4294901760
    %v418 = vsub.f32 %v416, %v417
    %v419 = vand.u32 %v418, 4294901760
    %420 = vmatpush1.msra.mxu0 %v419
    %421 = vmatprep.subr.mxu0 0.0
    %v422 = vand.u32 %v229, 4294901760
    %v423 = vsub.f32 %v229, %v422
    %v424 = vand.u32 %v423, 4294901760
    %v425 = vsub.f32 %v423, %v424
    %v426 = vand.u32 %v425, 4294901760
    %427 = vmatpush1.msra.mxu0 %v426
    %428 = vmatprep.subr.mxu0 0.0
    %v429 = vand.u32 %v230, 4294901760
    %v430 = vsub.f32 %v230, %v429
    %v431 = vand.u32 %v430, 4294901760
    %v432 = vsub.f32 %v430, %v431
    %v433 = vand.u32 %v432, 4294901760
    %434 = vmatpush1.msra.mxu0 %v433
    %435 = vmatprep.subr.mxu0 0.0
    %v436 = vand.u32 %v231, 4294901760
    %v437 = vsub.f32 %v231, %v436
    %v438 = vand.u32 %v437, 4294901760
    %v439 = vsub.f32 %v437, %v438
    %v440 = vand.u32 %v439, 4294901760
    %441 = vmatpush1.msra.mxu0 %v440
    %442 = vmatprep.subr.mxu0 0.0
    %443 = vmatpush1.msra.mxu0 0.0
    %444 = vmatprep.subr.mxu0 0.0
    %445 = vmatpush1.msra.mxu0 0.0
    %446 = vmatprep.subr.mxu0 0.0
    %447 = vmatpush1.msra.mxu0 0.0
    %448 = vmatprep.subr.mxu0 0.0
    %449 = vmatpush1.msra.mxu0 0.0
    %450 = vmatprep.subr.mxu0 0.0
    %451 = vmatpush1.msra.mxu0 0.0
    %452 = vmatprep.subr.mxu0 0.0
    %453 = vmatpush1.msra.mxu0 0.0
    %454 = vmatprep.subr.mxu0 0.0
    %455 = vmatpush1.msra.mxu0 0.0
    %456 = vmatprep.subr.mxu0 0.0
    %457 = vmatpush1.msra.mxu0 0.0
    %458 = vmatprep.subr.mxu0 0.0
    %459 = vmatpush1.msra.mxu0 0.0
    %460 = vmatprep.subr.mxu0 0.0
    %461 = vmatpush1.msra.mxu0 0.0
    %462 = vmatprep.subr.mxu0 0.0
    %463 = vmatpush1.msra.mxu0 0.0
    %464 = vmatprep.subr.mxu0 0.0
    %465 = vmatpush1.msra.mxu0 0.0
    %466 = vmatprep.subr.mxu0 0.0
    %467 = vmatpush1.msra.mxu0 0.0
    %468 = vmatprep.subr.mxu0 0.0
    %469 = vmatpush1.msra.mxu0 0.0
    %470 = vmatprep.subr.mxu0 0.0
    %471 = vmatpush1.msra.mxu0 0.0
    %472 = vmatprep.subr.mxu0 0.0
    %473 = vmatpush1.msra.mxu0 0.0
    %474 = vmatprep.mubr.f32.mxu0 0.0
    %v475 = vand.u32 %v215, 4294901760
    %476 = vmatmul.mubr.f32.gmra.mrb[0].mxu0 %v475
    %v477 = vpop.f32.mrb[0].mxu0
    %v478 = vadd.f32 %v327, %v477
    %v479 = vpop.f32.mrb[0].mxu0
    %480 = vdwg.mxu0
    %481 = vmatprep.subr.mxu0 0.0
    %v482 = vand.u32 %v216, 4294901760
    %v483 = vsub.f32 %v216, %v482
    %484 = vmatpush1.msra.mxu0 %v483
    %485 = vmatprep.subr.mxu0 0.0
    %v486 = vand.u32 %v217, 4294901760
    %v487 = vsub.f32 %v217, %v486
    %488 = vmatpush1.msra.mxu0 %v487
    %489 = vmatprep.subr.mxu0 0.0
    %v490 = vand.u32 %v218, 4294901760
    %v491 = vsub.f32 %v218, %v490
    %492 = vmatpush1.msra.mxu0 %v491
    %493 = vmatprep.subr.mxu0 0.0
    %v494 = vand.u32 %v219, 4294901760
    %v495 = vsub.f32 %v219, %v494
    %496 = vmatpush1.msra.mxu0 %v495
    %497 = vmatprep.subr.mxu0 0.0
    %v498 = vand.u32 %v220, 4294901760
    %v499 = vsub.f32 %v220, %v498
    %500 = vmatpush1.msra.mxu0 %v499
    %501 = vmatprep.subr.mxu0 0.0
    %v502 = vand.u32 %v221, 4294901760
    %v503 = vsub.f32 %v221, %v502
    %504 = vmatpush1.msra.mxu0 %v503
    %505 = vmatprep.subr.mxu0 0.0
    %v506 = vand.u32 %v222, 4294901760
    %v507 = vsub.f32 %v222, %v506
    %508 = vmatpush1.msra.mxu0 %v507
    %509 = vmatprep.subr.mxu0 0.0
    %v510 = vand.u32 %v223, 4294901760
    %v511 = vsub.f32 %v223, %v510
    %512 = vmatpush1.msra.mxu0 %v511
    %513 = vmatprep.subr.mxu0 0.0
    %v514 = vand.u32 %v224, 4294901760
    %v515 = vsub.f32 %v224, %v514
    %516 = vmatpush1.msra.mxu0 %v515
    %517 = vmatprep.subr.mxu0 0.0
    %v518 = vand.u32 %v225, 4294901760
    %v519 = vsub.f32 %v225, %v518
    %520 = vmatpush1.msra.mxu0 %v519
    %521 = vmatprep.subr.mxu0 0.0
    %v522 = vand.u32 %v226, 4294901760
    %v523 = vsub.f32 %v226, %v522
    %524 = vmatpush1.msra.mxu0 %v523
    %525 = vmatprep.subr.mxu0 0.0
    %v526 = vand.u32 %v227, 4294901760
    %v527 = vsub.f32 %v227, %v526
    %528 = vmatpush1.msra.mxu0 %v527
    %529 = vmatprep.subr.mxu0 0.0
    %v530 = vand.u32 %v228, 4294901760
    %v531 = vsub.f32 %v228, %v530
    %532 = vmatpush1.msra.mxu0 %v531
    %533 = vmatprep.subr.mxu0 0.0
    %v534 = vand.u32 %v229, 4294901760
    %v535 = vsub.f32 %v229, %v534
    %536 = vmatpush1.msra.mxu0 %v535
    %537 = vmatprep.subr.mxu0 0.0
    %v538 = vand.u32 %v230, 4294901760
    %v539 = vsub.f32 %v230, %v538
    %540 = vmatpush1.msra.mxu0 %v539
    %541 = vmatprep.subr.mxu0 0.0
    %v542 = vand.u32 %v231, 4294901760
    %v543 = vsub.f32 %v231, %v542
    %544 = vmatpush1.msra.mxu0 %v543
    %545 = vmatprep.subr.mxu0 0.0
    %546 = vmatpush1.msra.mxu0 0.0
    %547 = vmatprep.subr.mxu0 0.0
    %548 = vmatpush1.msra.mxu0 0.0
    %549 = vmatprep.subr.mxu0 0.0
    %550 = vmatpush1.msra.mxu0 0.0
    %551 = vmatprep.subr.mxu0 0.0
    %552 = vmatpush1.msra.mxu0 0.0
    %553 = vmatprep.subr.mxu0 0.0
    %554 = vmatpush1.msra.mxu0 0.0
    %555 = vmatprep.subr.mxu0 0.0
    %556 = vmatpush1.msra.mxu0 0.0
    %557 = vmatprep.subr.mxu0 0.0
    %558 = vmatpush1.msra.mxu0 0.0
    %559 = vmatprep.subr.mxu0 0.0
    %560 = vmatpush1.msra.mxu0 0.0
    %561 = vmatprep.subr.mxu0 0.0
    %562 = vmatpush1.msra.mxu0 0.0
    %563 = vmatprep.subr.mxu0 0.0
    %564 = vmatpush1.msra.mxu0 0.0
    %565 = vmatprep.subr.mxu0 0.0
    %566 = vmatpush1.msra.mxu0 0.0
    %567 = vmatprep.subr.mxu0 0.0
    %568 = vmatpush1.msra.mxu0 0.0
    %569 = vmatprep.subr.mxu0 0.0
    %570 = vmatpush1.msra.mxu0 0.0
    %571 = vmatprep.subr.mxu0 0.0
    %572 = vmatpush1.msra.mxu0 0.0
    %573 = vmatprep.subr.mxu0 0.0
    %574 = vmatpush1.msra.mxu0 0.0
    %575 = vmatprep.subr.mxu0 0.0
    %576 = vmatpush1.msra.mxu0 0.0
    %577 = vmatprep.mubr.f32.mxu0 0.0
    %v578 = vand.u32 %v215, 4294901760
    %v579 = vsub.f32 %v215, %v578
    %580 = vmatmul.mubr.f32.gmra.mrb[0].mxu0 %v579
    %v581 = vpop.f32.mrb[0].mxu0
    %v582 = vadd.f32 %v478, %v581
    %v583 = vpop.f32.mrb[0].mxu0
    %584 = vdwg.mxu0
    %585 = vmatprep.subr.mxu0 0.0
    %v586 = vand.u32 %v216, 4294901760
    %587 = vmatpush1.msra.mxu0 %v586
    %588 = vmatprep.subr.mxu0 0.0
    %v589 = vand.u32 %v217, 4294901760
    %590 = vmatpush1.msra.mxu0 %v589
    %591 = vmatprep.subr.mxu0 0.0
    %v592 = vand.u32 %v218, 4294901760
    %593 = vmatpush1.msra.mxu0 %v592
    %594 = vmatprep.subr.mxu0 0.0
    %v595 = vand.u32 %v219, 4294901760
    %596 = vmatpush1.msra.mxu0 %v595
    %597 = vmatprep.subr.mxu0 0.0
    %v598 = vand.u32 %v220, 4294901760
    %599 = vmatpush1.msra.mxu0 %v598
    %600 = vmatprep.subr.mxu0 0.0
    %v601 = vand.u32 %v221, 4294901760
    %602 = vmatpush1.msra.mxu0 %v601
    %603 = vmatprep.subr.mxu0 0.0
    %v604 = vand.u32 %v222, 4294901760
    %605 = vmatpush1.msra.mxu0 %v604
    %606 = vmatprep.subr.mxu0 0.0
    %v607 = vand.u32 %v223, 4294901760
    %608 = vmatpush1.msra.mxu0 %v607
    %609 = vmatprep.subr.mxu0 0.0
    %v610 = vand.u32 %v224, 4294901760
    %611 = vmatpush1.msra.mxu0 %v610
    %612 = vmatprep.subr.mxu0 0.0
    %v613 = vand.u32 %v225, 4294901760
    %614 = vmatpush1.msra.mxu0 %v613
    %615 = vmatprep.subr.mxu0 0.0
    %v616 = vand.u32 %v226, 4294901760
    %617 = vmatpush1.msra.mxu0 %v616
    %618 = vmatprep.subr.mxu0 0.0
    %v619 = vand.u32 %v227, 4294901760
    %620 = vmatpush1.msra.mxu0 %v619
    %621 = vmatprep.subr.mxu0 0.0
    %v622 = vand.u32 %v228, 4294901760
    %623 = vmatpush1.msra.mxu0 %v622
    %624 = vmatprep.subr.mxu0 0.0
    %v625 = vand.u32 %v229, 4294901760
    %626 = vmatpush1.msra.mxu0 %v625
    %627 = vmatprep.subr.mxu0 0.0
    %v628 = vand.u32 %v230, 4294901760
    %629 = vmatpush1.msra.mxu0 %v628
    %630 = vmatprep.subr.mxu0 0.0
    %v631 = vand.u32 %v231, 4294901760
    %632 = vmatpush1.msra.mxu0 %v631
    %633 = vmatprep.subr.mxu0 0.0
    %634 = vmatpush1.msra.mxu0 0.0
    %635 = vmatprep.subr.mxu0 0.0
    %636 = vmatpush1.msra.mxu0 0.0
    %637 = vmatprep.subr.mxu0 0.0
    %638 = vmatpush1.msra.mxu0 0.0
    %639 = vmatprep.subr.mxu0 0.0
    %640 = vmatpush1.msra.mxu0 0.0
    %641 = vmatprep.subr.mxu0 0.0
    %642 = vmatpush1.msra.mxu0 0.0
    %643 = vmatprep.subr.mxu0 0.0
    %644 = vmatpush1.msra.mxu0 0.0
    %645 = vmatprep.subr.mxu0 0.0
    %646 = vmatpush1.msra.mxu0 0.0
    %647 = vmatprep.subr.mxu0 0.0
    %648 = vmatpush1.msra.mxu0 0.0
    %649 = vmatprep.subr.mxu0 0.0
    %650 = vmatpush1.msra.mxu0 0.0
    %651 = vmatprep.subr.mxu0 0.0
    %652 = vmatpush1.msra.mxu0 0.0
    %653 = vmatprep.subr.mxu0 0.0
    %654 = vmatpush1.msra.mxu0 0.0
    %655 = vmatprep.subr.mxu0 0.0
    %656 = vmatpush1.msra.mxu0 0.0
    %657 = vmatprep.subr.mxu0 0.0
    %658 = vmatpush1.msra.mxu0 0.0
    %659 = vmatprep.subr.mxu0 0.0
    %660 = vmatpush1.msra.mxu0 0.0
    %661 = vmatprep.subr.mxu0 0.0
    %662 = vmatpush1.msra.mxu0 0.0
    %663 = vmatprep.subr.mxu0 0.0
    %664 = vmatpush1.msra.mxu0 0.0
    %665 = vmatprep.mubr.f32.mxu0 0.0
    %v666 = vand.u32 %v215, 4294901760
    %v667 = vsub.f32 %v215, %v666
    %v668 = vand.u32 %v667, 4294901760
    %669 = vmatmul.mubr.f32.gmra.mrb[0].mxu0 %v668
    %v670 = vpop.f32.mrb[0].mxu0
    %v671 = vadd.f32 %v582, %v670
    %v672 = vpop.f32.mrb[0].mxu0
    %673 = vdwg.mxu0
    %674 = vmatprep.subr.mxu0 0.0
    %v675 = vand.u32 %v216, 4294901760
    %v676 = vsub.f32 %v216, %v675
    %v677 = vand.u32 %v676, 4294901760
    %678 = vmatpush1.msra.mxu0 %v677
    %679 = vmatprep.subr.mxu0 0.0
    %v680 = vand.u32 %v217, 4294901760
    %v681 = vsub.f32 %v217, %v680
    %v682 = vand.u32 %v681, 4294901760
    %683 = vmatpush1.msra.mxu0 %v682
    %684 = vmatprep.subr.mxu0 0.0
    %v685 = vand.u32 %v218, 4294901760
    %v686 = vsub.f32 %v218, %v685
    %v687 = vand.u32 %v686, 4294901760
    %688 = vmatpush1.msra.mxu0 %v687
    %689 = vmatprep.subr.mxu0 0.0
    %v690 = vand.u32 %v219, 4294901760
    %v691 = vsub.f32 %v219, %v690
    %v692 = vand.u32 %v691, 4294901760
    %693 = vmatpush1.msra.mxu0 %v692
    %694 = vmatprep.subr.mxu0 0.0
    %v695 = vand.u32 %v220, 4294901760
    %v696 = vsub.f32 %v220, %v695
    %v697 = vand.u32 %v696, 4294901760
    %698 = vmatpush1.msra.mxu0 %v697
    %699 = vmatprep.subr.mxu0 0.0
    %v700 = vand.u32 %v221, 4294901760
    %v701 = vsub.f32 %v221, %v700
    %v702 = vand.u32 %v701, 4294901760
    %703 = vmatpush1.msra.mxu0 %v702
    %704 = vmatprep.subr.mxu0 0.0
    %v705 = vand.u32 %v222, 4294901760
    %v706 = vsub.f32 %v222, %v705
    %v707 = vand.u32 %v706, 4294901760
    %708 = vmatpush1.msra.mxu0 %v707
    %709 = vmatprep.subr.mxu0 0.0
    %v710 = vand.u32 %v223, 4294901760
    %v711 = vsub.f32 %v223, %v710
    %v712 = vand.u32 %v711, 4294901760
    %713 = vmatpush1.msra.mxu0 %v712
    %714 = vmatprep.subr.mxu0 0.0
    %v715 = vand.u32 %v224, 4294901760
    %v716 = vsub.f32 %v224, %v715
    %v717 = vand.u32 %v716, 4294901760
    %718 = vmatpush1.msra.mxu0 %v717
    %719 = vmatprep.subr.mxu0 0.0
    %v720 = vand.u32 %v225, 4294901760
    %v721 = vsub.f32 %v225, %v720
    %v722 = vand.u32 %v721, 4294901760
    %723 = vmatpush1.msra.mxu0 %v722
    %724 = vmatprep.subr.mxu0 0.0
    %v725 = vand.u32 %v226, 4294901760
    %v726 = vsub.f32 %v226, %v725
    %v727 = vand.u32 %v726, 4294901760
    %728 = vmatpush1.msra.mxu0 %v727
    %729 = vmatprep.subr.mxu0 0.0
    %v730 = vand.u32 %v227, 4294901760
    %v731 = vsub.f32 %v227, %v730
    %v732 = vand.u32 %v731, 4294901760
    %733 = vmatpush1.msra.mxu0 %v732
    %734 = vmatprep.subr.mxu0 0.0
    %v735 = vand.u32 %v228, 4294901760
    %v736 = vsub.f32 %v228, %v735
    %v737 = vand.u32 %v736, 4294901760
    %738 = vmatpush1.msra.mxu0 %v737
    %739 = vmatprep.subr.mxu0 0.0
    %v740 = vand.u32 %v229, 4294901760
    %v741 = vsub.f32 %v229, %v740
    %v742 = vand.u32 %v741, 4294901760
    %743 = vmatpush1.msra.mxu0 %v742
    %744 = vmatprep.subr.mxu0 0.0
    %v745 = vand.u32 %v230, 4294901760
    %v746 = vsub.f32 %v230, %v745
    %v747 = vand.u32 %v746, 4294901760
    %748 = vmatpush1.msra.mxu0 %v747
    %749 = vmatprep.subr.mxu0 0.0
    %v750 = vand.u32 %v231, 4294901760
    %v751 = vsub.f32 %v231, %v750
    %v752 = vand.u32 %v751, 4294901760
    %753 = vmatpush1.msra.mxu0 %v752
    %754 = vmatprep.subr.mxu0 0.0
    %755 = vmatpush1.msra.mxu0 0.0
    %756 = vmatprep.subr.mxu0 0.0
    %757 = vmatpush1.msra.mxu0 0.0
    %758 = vmatprep.subr.mxu0 0.0
    %759 = vmatpush1.msra.mxu0 0.0
    %760 = vmatprep.subr.mxu0 0.0
    %761 = vmatpush1.msra.mxu0 0.0
    %762 = vmatprep.subr.mxu0 0.0
    %763 = vmatpush1.msra.mxu0 0.0
    %764 = vmatprep.subr.mxu0 0.0
    %765 = vmatpush1.msra.mxu0 0.0
    %766 = vmatprep.subr.mxu0 0.0
    %767 = vmatpush1.msra.mxu0 0.0
    %768 = vmatprep.subr.mxu0 0.0
    %769 = vmatpush1.msra.mxu0 0.0
    %770 = vmatprep.subr.mxu0 0.0
    %771 = vmatpush1.msra.mxu0 0.0
    %772 = vmatprep.subr.mxu0 0.0
    %773 = vmatpush1.msra.mxu0 0.0
    %774 = vmatprep.subr.mxu0 0.0
    %775 = vmatpush1.msra.mxu0 0.0
    %776 = vmatprep.subr.mxu0 0.0
    %777 = vmatpush1.msra.mxu0 0.0
    %778 = vmatprep.subr.mxu0 0.0
    %779 = vmatpush1.msra.mxu0 0.0
    %780 = vmatprep.subr.mxu0 0.0
    %781 = vmatpush1.msra.mxu0 0.0
    %782 = vmatprep.subr.mxu0 0.0
    %783 = vmatpush1.msra.mxu0 0.0
    %784 = vmatprep.subr.mxu0 0.0
    %785 = vmatpush1.msra.mxu0 0.0
    %786 = vmatprep.mubr.f32.mxu0 0.0
    %v787 = vand.u32 %v215, 4294901760
    %788 = vmatmul.mubr.f32.gmra.mrb[0].mxu0 %v787
    %v789 = vpop.f32.mrb[0].mxu0
    %v790 = vadd.f32 %v671, %v789
    %v791 = vpop.f32.mrb[0].mxu0
    %792 = vdwg.mxu0
    %793 = vmatprep.subr.mxu0 0.0
    %v794 = vand.u32 %v216, 4294901760
    %795 = vmatpush1.msra.mxu0 %v794
    %796 = vmatprep.subr.mxu0 0.0
    %v797 = vand.u32 %v217, 4294901760
    %798 = vmatpush1.msra.mxu0 %v797
    %799 = vmatprep.subr.mxu0 0.0
    %v800 = vand.u32 %v218, 4294901760
    %801 = vmatpush1.msra.mxu0 %v800
    %802 = vmatprep.subr.mxu0 0.0
    %v803 = vand.u32 %v219, 4294901760
    %804 = vmatpush1.msra.mxu0 %v803
    %805 = vmatprep.subr.mxu0 0.0
    %v806 = vand.u32 %v220, 4294901760
    %807 = vmatpush1.msra.mxu0 %v806
    %808 = vmatprep.subr.mxu0 0.0
    %v809 = vand.u32 %v221, 4294901760
    %810 = vmatpush1.msra.mxu0 %v809
    %811 = vmatprep.subr.mxu0 0.0
    %v812 = vand.u32 %v222, 4294901760
    %813 = vmatpush1.msra.mxu0 %v812
    %814 = vmatprep.subr.mxu0 0.0
    %v815 = vand.u32 %v223, 4294901760
    %816 = vmatpush1.msra.mxu0 %v815
    %817 = vmatprep.subr.mxu0 0.0
    %v818 = vand.u32 %v224, 4294901760
    %819 = vmatpush1.msra.mxu0 %v818
    %820 = vmatprep.subr.mxu0 0.0
    %v821 = vand.u32 %v225, 4294901760
    %822 = vmatpush1.msra.mxu0 %v821
    %823 = vmatprep.subr.mxu0 0.0
    %v824 = vand.u32 %v226, 4294901760
    %825 = vmatpush1.msra.mxu0 %v824
    %826 = vmatprep.subr.mxu0 0.0
    %v827 = vand.u32 %v227, 4294901760
    %828 = vmatpush1.msra.mxu0 %v827
    %829 = vmatprep.subr.mxu0 0.0
    %v830 = vand.u32 %v228, 4294901760
    %831 = vmatpush1.msra.mxu0 %v830
    %832 = vmatprep.subr.mxu0 0.0
    %v833 = vand.u32 %v229, 4294901760
    %834 = vmatpush1.msra.mxu0 %v833
    %835 = vmatprep.subr.mxu0 0.0
    %v836 = vand.u32 %v230, 4294901760
    %837 = vmatpush1.msra.mxu0 %v836
    %838 = vmatprep.subr.mxu0 0.0
    %v839 = vand.u32 %v231, 4294901760
    %840 = vmatpush1.msra.mxu0 %v839
    %841 = vmatprep.subr.mxu0 0.0
    %842 = vmatpush1.msra.mxu0 0.0
    %843 = vmatprep.subr.mxu0 0.0
    %844 = vmatpush1.msra.mxu0 0.0
    %845 = vmatprep.subr.mxu0 0.0
    %846 = vmatpush1.msra.mxu0 0.0
    %847 = vmatprep.subr.mxu0 0.0
    %848 = vmatpush1.msra.mxu0 0.0
    %849 = vmatprep.subr.mxu0 0.0
    %850 = vmatpush1.msra.mxu0 0.0
    %851 = vmatprep.subr.mxu0 0.0
    %852 = vmatpush1.msra.mxu0 0.0
    %853 = vmatprep.subr.mxu0 0.0
    %854 = vmatpush1.msra.mxu0 0.0
    %855 = vmatprep.subr.mxu0 0.0
    %856 = vmatpush1.msra.mxu0 0.0
    %857 = vmatprep.subr.mxu0 0.0
    %858 = vmatpush1.msra.mxu0 0.0
    %859 = vmatprep.subr.mxu0 0.0
    %860 = vmatpush1.msra.mxu0 0.0
    %861 = vmatprep.subr.mxu0 0.0
    %862 = vmatpush1.msra.mxu0 0.0
    %863 = vmatprep.subr.mxu0 0.0
    %864 = vmatpush1.msra.mxu0 0.0
    %865 = vmatprep.subr.mxu0 0.0
    %866 = vmatpush1.msra.mxu0 0.0
    %867 = vmatprep.subr.mxu0 0.0
    %868 = vmatpush1.msra.mxu0 0.0
    %869 = vmatprep.subr.mxu0 0.0
    %870 = vmatpush1.msra.mxu0 0.0
    %871 = vmatprep.subr.mxu0 0.0
    %872 = vmatpush1.msra.mxu0 0.0
    %873 = vmatprep.mubr.f32.mxu0 0.0
    %v874 = vand.u32 %v215, 4294901760
    %875 = vmatmul.mubr.f32.gmra.mrb[0].mxu0 %v874
    %v876 = vpop.f32.mrb[0].mxu0
    %v877 = vadd.f32 %v790, %v876
    %v878 = vpop.f32.mrb[0].mxu0
    %879 = vdwg.mxu0
    %v880 = vtanh.pop %v877
    %881 = vst [vmem:[#allocation9] sm:$0xff] %v880
    // Predicated region
    $region46: #{tpu_custom_call.1} parent=1 // pred_check
      _
    $region47: #{tpu_custom_call.1} parent=1 // pred_check_branch
      %883 = sbr.rel (0) target = $region49
    $region48: #{tpu_custom_call.1} parent=1 // pred_region
      %s885 = ssub.s32 128, 128
      %886 = vsyncadd [#allocation8], %s885
      %s888 = sshll.u32 [#allocation9], 4
      %s889 = int_to_ptr.vmem [resolvable:$true] %s888
      %891 = dma.vmem_to_hbm [thread:$0]  %s889, 128, %s4, [#allocation8]
    $region49: #{tpu_custom_call.1} parent=1 // pred_fallthru
      _
    // Predicated region
    $region50: #{tpu_custom_call.1} parent=1 // pred_check
      _
    $region51: #{tpu_custom_call.1} parent=1 // pred_check_branch
      %893 = sbr.rel (0) target = $region53
    $region52: #{tpu_custom_call.1} parent=1 // pred_region
      %894 = dma.done [#allocation8], 128
    $region53: #{tpu_custom_call.1} parent=1 // pred_fallthru
      _
    %895 = vsyncpa [#allocation7], 1
    %896 = vsyncpa [#allocation8], 1
  %897 = vsyncmov [#allocation3]
  %s898 = vpop.sfrf %897
  %p899 = scmp.eq.s32.totalorder %s898, 0
  %p900 = pneg %p899
  %902 = shalt.err (%p900)
  %s903 = scalar_lea.sflag [#allocation3], 1
  %904 = vsyncmov %s903
  %s905 = vpop.sfrf %904
  %p906 = scmp.eq.s32.totalorder %s905, 0
  %p907 = pneg %p906
  %909 = shalt.err (%p907)
  %s910 = scalar_lea.sflag [#allocation3], 2
  %911 = vsyncmov %s910
  %s912 = vpop.sfrf %911
  %p913 = scmp.eq.s32.totalorder %s912, 0
  %p914 = pneg %p913
  %916 = shalt.err (%p914)
  %s917 = scalar_lea.sflag [#allocation3], 3
  %918 = vsyncmov %s917
  %s919 = vpop.sfrf %918
  %p920 = scmp.eq.s32.totalorder %s919, 0
  %p921 = pneg %p920
  %923 = shalt.err (%p921)
  %s924 = scalar_lea.sflag [#allocation3], 4
  %925 = vsyncmov %s924
  %s926 = vpop.sfrf %925
  %p927 = scmp.eq.s32.totalorder %s926, 0
  %p928 = pneg %p927
  %930 = shalt.err (%p928)
  %s931 = scalar_lea.sflag [#allocation3], 5
  %932 = vsyncmov %s931
  %s933 = vpop.sfrf %932
  %p934 = scmp.eq.s32.totalorder %s933, 0
  %p935 = pneg %p934
  %937 = shalt.err (%p935)
  %s938 = scalar_lea.sflag [#allocation3], 6
  %939 = vsyncmov %s938
  %s940 = vpop.sfrf %939
  %p941 = scmp.eq.s32.totalorder %s940, 0
  %p942 = pneg %p941
  %944 = shalt.err (%p942)
  %s945 = scalar_lea.sflag [#allocation3], 7
  %946 = vsyncmov %s945
  %s947 = vpop.sfrf %946
  %p948 = scmp.eq.s32.totalorder %s947, 0
  %p949 = pneg %p948
  %951 = shalt.err (%p949)

</llo_original>
